<compile_context>
chip_gen: v7x
topology: tpu7x:2x2x1
jax: 0.10.0
libtpu: 0.0.40
codegen_flags: <defaults>
</compile_context>

<pallas_src>
import jax
import jax.numpy as jnp
from jax import lax
from jax.experimental import pallas as pl
from jax.experimental.pallas import tpu as pltpu

EPS = 1e-5
CP = 128                        # output-channel lane padding (one vreg lane width)
KP = 128                        # contraction padding: 9*Cin packed into one K=128 slab
VMEM_LIMIT = 32 * 1024 * 1024   # scoped-VMEM budget that is safe on v5e/v6e/v7x


# ---------------------------------------------------------------------------
# Kernel 1: 3x3 conv as ONE K=128 MXU matmul per row tile + BN partial stats
# ---------------------------------------------------------------------------
def _conv_stats_kernel(p_ref, w_ref, out_ref, stats_ref):
    """p_ref:(TM,KP) bf16 patches, w_ref:(KP,CP) bf16 packed taps,
    out_ref:(TM,CP) bf16 raw conv output,
    stats_ref:(1,2,CP) f32 = [sum ; sum of squares] of this tile's output."""
    acc = jnp.dot(p_ref[...], w_ref[...], preferred_element_type=jnp.float32)
    y = acc.astype(out_ref.dtype)
    out_ref[...] = y
    yf = y.astype(jnp.float32)            # stats describe exactly what was stored
    s = jnp.sum(yf, axis=0, keepdims=True)
    ss = jnp.sum(yf * yf, axis=0, keepdims=True)
    stats_ref[0] = jnp.concatenate([s, ss], axis=0)


def conv3x3_stats(patches, w_packed, tm):
    mp, kp = patches.shape
    cp = w_packed.shape[1]
    nt = mp // tm
    return pl.pallas_call(
        _conv_stats_kernel,
        out_shape=(jax.ShapeDtypeStruct((mp, cp), jnp.bfloat16),
                   jax.ShapeDtypeStruct((nt, 2, cp), jnp.float32)),
        grid=(nt,),
        in_specs=[pl.BlockSpec((tm, kp), lambda i: (i, 0)),
                  pl.BlockSpec((kp, cp), lambda i: (0, 0))],
        out_specs=(pl.BlockSpec((tm, cp), lambda i: (i, 0)),
                   pl.BlockSpec((1, 2, cp), lambda i: (i, 0, 0))),
        compiler_params=pltpu.CompilerParams(
            dimension_semantics=("parallel",),
            vmem_limit_bytes=VMEM_LIMIT),
    )(patches, w_packed)


# ---------------------------------------------------------------------------
# Kernel 2: bn2 (scale/shift form) + residual add + ReLU, row-tiled
# ---------------------------------------------------------------------------
def _bn_add_relu_kernel(x_ref, scale_ref, shift_ref, id_ref, o_ref):
    y = (x_ref[...].astype(jnp.float32) * scale_ref[...] + shift_ref[...]
         + id_ref[...].astype(jnp.float32))
    o_ref[...] = jnp.maximum(y, 0.0).astype(o_ref.dtype)


def bn_add_relu(x, scale, shift, identity, tm):
    mp, cp = x.shape
    nt = mp // tm
    row = pl.BlockSpec((tm, cp), lambda i: (i, 0))
    vec = pl.BlockSpec((1, cp), lambda i: (0, 0))
    return pl.pallas_call(
        _bn_add_relu_kernel,
        out_shape=jax.ShapeDtypeStruct((mp, cp), jnp.float32),
        grid=(nt,),
        in_specs=[row, vec, vec, row],
        out_specs=row,
        compiler_params=pltpu.CompilerParams(
            dimension_semantics=("parallel",),
            vmem_limit_bytes=VMEM_LIMIT),
    )(x, scale, shift, identity)


# ---------------------------------------------------------------------------
# Plain-JAX glue (tiny bf16 layout passes + per-channel stat folding)
# ---------------------------------------------------------------------------
def _pick_row_tile(m, max_tile=512, min_steps=4):
    """Largest power-of-two row tile <= max_tile still giving >= min_steps grid
    steps (so each v7x TensorCore sees >= 2 steps and the DMA pipeline overlaps).
    For real ResNet sizes this returns max_tile (512, the 85%+ roofline point)."""
    t = max(8, m // min_steps)
    t = 1 << (t.bit_length() - 1)          # round down to a power of two
    return max(8, min(max_tile, t))


def _im2col_patches(x_nhwc, m_pad):
    """(N,H,W,C) bf16 -> (m_pad, KP) bf16 patch matrix; lane order (kh, kw, cin)."""
    n, h, w, c = x_nhwc.shape
    xp = jnp.pad(x_nhwc, ((0, 0), (1, 1), (1, 1), (0, 0)))
    taps = [xp[:, dh:dh + h, dw:dw + w, :] for dh in range(3) for dw in range(3)]
    p = jnp.concatenate(taps, axis=-1).reshape(n * h * w, 9 * c)
    p = jnp.pad(p, ((0, m_pad - n * h * w), (0, KP - 9 * c)))
    return p.astype(jnp.bfloat16)


def _pack_conv_weight(w_oihw):
    """PyTorch (Cout,Cin,3,3) -> (KP, CP) bf16 matching _im2col_patches lane order."""
    cout, cin = w_oihw.shape[:2]
    wt = jnp.transpose(w_oihw.astype(jnp.float32), (2, 3, 1, 0)).reshape(9 * cin, cout)
    wp = jnp.zeros((KP, CP), jnp.float32).at[:9 * cin, :cout].set(wt)
    return wp.astype(jnp.bfloat16)


def _fold_bn(stats, gamma, beta, m_true):
    """Per-tile (sum, sumsq) -> per-channel scale/shift so that  y = x*scale+shift."""
    s = jnp.sum(stats[:, 0, :], axis=0)
    ss = jnp.sum(stats[:, 1, :], axis=0)
    mean = s / m_true
    var = jnp.maximum(ss / m_true - mean * mean, 0.0)   # biased var (training-mode BN)
    g = jnp.pad(gamma.astype(jnp.float32), (0, CP - gamma.shape[0]))
    b = jnp.pad(beta.astype(jnp.float32), (0, CP - beta.shape[0]))
    scale = g * lax.rsqrt(var + EPS)
    shift = b - mean * scale
    return scale.reshape(1, CP), shift.reshape(1, CP)


def basic_block_forward(x_nchw, params):
    """BasicBlock.forward (stride=1, downsample=None), BatchNorm in training mode."""
    n, c, h, w = x_nchw.shape
    cout = params["w1"].shape[0]
    assert 9 * c <= KP and 9 * cout <= KP and cout <= CP, \
        "single K=128 tap packing assumes 9*Cin <= 128 and Cout <= 128"
    m = n * h * w
    tm = _pick_row_tile(m)
    m_pad = pl.cdiv(m, tm) * tm

    # bf16 from the start; the only glue arrays are lane-dense bf16 (M_pad, 128).
    x_nhwc = jnp.transpose(x_nchw, (0, 2, 3, 1)).astype(jnp.bfloat16)
    patches1 = _im2col_patches(x_nhwc, m_pad)
    identity = jnp.pad(x_nhwc.reshape(m, c), ((0, m_pad - m), (0, CP - c)))

    # conv1 + BN1 partial stats -> fold into scale/shift
    conv1, stats1 = conv3x3_stats(patches1, _pack_conv_weight(params["w1"]), tm)
    scale1, shift1 = _fold_bn(stats1, params["g1"], params["b1"], m)

    # bn1 + ReLU fused with conv2's patch gather (one XLA pass over the bf16
    # conv1 output; the activation must precede the spatial zero-pad so that
    # border taps stay exactly 0 — relu(bn(0)) != 0 in general).
    act1 = jnp.maximum(conv1[:m].astype(jnp.float32) * scale1 + shift1, 0.0)
    act1 = act1[:, :cout].reshape(n, h, w, cout).astype(jnp.bfloat16)
    patches2 = _im2col_patches(act1, m_pad)

    # conv2 + BN2 partial stats -> fold into scale/shift
    conv2, stats2 = conv3x3_stats(patches2, _pack_conv_weight(params["w2"]), tm)
    scale2, shift2 = _fold_bn(stats2, params["g2"], params["b2"], m)

    # bn2 + residual add + ReLU (Pallas, lane-dense bf16 inputs, f32 output)
    out = bn_add_relu(conv2, scale2, shift2, identity, tm)
    out = out[:m, :cout].reshape(n, h, w, cout)
    return jnp.transpose(out, (0, 3, 1, 2))                 # back to NCHW


def basic_block_reference(x_nchw, params):
    """Pure-JAX f32 reference (matches PyTorch forward in training mode)."""
    def conv3x3(x, wgt):
        return lax.conv_general_dilated(
            x, wgt, window_strides=(1, 1), padding=((1, 1), (1, 1)),
            dimension_numbers=("NCHW", "OIHW", "NCHW"))

    def bn_train(x, g, b):
        mean = jnp.mean(x, axis=(0, 2, 3), keepdims=True)
        var = jnp.mean(jnp.square(x - mean), axis=(0, 2, 3), keepdims=True)
        xhat = (x - mean) * lax.rsqrt(var + EPS)
        return xhat * g.reshape(1, -1, 1, 1) + b.reshape(1, -1, 1, 1)

    out = jnp.maximum(bn_train(conv3x3(x_nchw, params["w1"]),
                               params["g1"], params["b1"]), 0.0)
    out = bn_train(conv3x3(out, params["w2"]), params["g2"], params["b2"])
    return jnp.maximum(out + x_nchw, 0.0)


if __name__ == "__main__":
    # Shapes consistent with the module: in_channels == out_channels = 4,
    # stride=1, downsample=None (residual add is shape-compatible).
    N, C, H, W = 2, 4, 16, 16

    key = jax.random.PRNGKey(0)
    k_x, k_w1, k_w2, k_g1, k_b1, k_g2, k_b2 = jax.random.split(key, 7)

    x = jax.random.normal(k_x, (N, C, H, W), jnp.float32)
    params = {
        "w1": 0.1 * jax.random.normal(k_w1, (C, C, 3, 3), jnp.float32),
        "w2": 0.1 * jax.random.normal(k_w2, (C, C, 3, 3), jnp.float32),
        "g1": 1.0 + 0.1 * jax.random.normal(k_g1, (C,), jnp.float32),
        "b1": 0.1 * jax.random.normal(k_b1, (C,), jnp.float32),
        "g2": 1.0 + 0.1 * jax.random.normal(k_g2, (C,), jnp.float32),
        "b2": 0.1 * jax.random.normal(k_b2, (C,), jnp.float32),
    }

    fwd = jax.jit(basic_block_forward)
    out = jax.block_until_ready(fwd(x, params))
    ref = jax.block_until_ready(basic_block_reference(x, params))

    assert out.shape == (N, C, H, W)
    # Two chained bf16 MXU convs with bf16 intermediates vs. an f32 reference;
    # BatchNorm re-normalizes to unit scale, so compare at a few x bf16 epsilon.
    assert jnp.allclose(out, ref, atol=5e-2, rtol=5e-2), "mismatch vs reference"
    print("KERNEL_OK")
</pallas_src>

<mosaic_0001>
module attributes {stable_mosaic.version = 11 : i64} {
  func.func @_conv_stats_kernel(%arg0: i32, %arg1: memref<128x128xbf16, #tpu.memory_space<vmem>>, %arg2: memref<128x128xbf16, #tpu.memory_space<vmem>>, %arg3: memref<128x128xbf16, #tpu.memory_space<vmem>>, %arg4: memref<1x2x128xf32, #tpu.memory_space<vmem>>) attributes {dimension_semantics = [#tpu.dimension_semantics<parallel>], iteration_bounds = array<i64: 4>, scalar_prefetch = 0 : i64, scratch_operands = 0 : i64, tpu.core_type = #tpu.core_type<tc>, window_params = [{transform_indices = @transform_0, window_bounds = array<i64: 128, 128>}, {pipeline_mode = #tpu.pipeline_mode<synchronous>, transform_indices = @transform_1, window_bounds = array<i64: 128, 128>}, {transform_indices = @transform_2, window_bounds = array<i64: 128, 128>}, {transform_indices = @transform_3, window_bounds = array<i64: 1, 2, 128>}]} {
    %c0 = arith.constant 0 : index
    %c0_0 = arith.constant 0 : index
    %0 = vector.load %arg1[%c0, %c0_0] : memref<128x128xbf16, #tpu.memory_space<vmem>>, vector<128x128xbf16>
    %c0_1 = arith.constant 0 : index
    %c0_2 = arith.constant 0 : index
    %1 = vector.load %arg2[%c0_1, %c0_2] : memref<128x128xbf16, #tpu.memory_space<vmem>>, vector<128x128xbf16>
    %cst = arith.constant dense<0.000000e+00> : vector<128x128xf32>
    %2 = tpu.matmul %0, %1, %cst {dimension_numbers = #tpu.dot_dimension_numbers<[1], [0], [0], [1], [0, 0, 1, 1], [], []>} : vector<128x128xbf16>, vector<128x128xbf16>, vector<128x128xf32> -> vector<128x128xf32>
    %3 = arith.truncf %2 : vector<128x128xf32> to vector<128x128xbf16>
    %c0_3 = arith.constant 0 : index
    %c0_4 = arith.constant 0 : index
    %4 = vector.load %arg3[%c0_3, %c0_4] : memref<128x128xbf16, #tpu.memory_space<vmem>>, vector<128x128xbf16>
    tpu.vector_store %arg3[%c0_3, %c0_4], %3 {strides = array<i32>} : memref<128x128xbf16, #tpu.memory_space<vmem>>, vector<128x128xbf16>,
    %5 = arith.extf %3 : vector<128x128xbf16> to vector<128x128xf32>
    %cst_5 = arith.constant dense<0.000000e+00> : vector<128xf32>
    %6 = vector.multi_reduction <add>, %5, %cst_5 [0] : vector<128x128xf32> to vector<128xf32>
    %7 = vector.shape_cast %6 : vector<128xf32> to vector<1x128xf32>
    %8 = arith.mulf %5, %5 : vector<128x128xf32>
    %cst_6 = arith.constant dense<0.000000e+00> : vector<128xf32>
    %9 = vector.multi_reduction <add>, %8, %cst_6 [0] : vector<128x128xf32> to vector<128xf32>
    %10 = vector.shape_cast %9 : vector<128xf32> to vector<1x128xf32>
    %11 = tpu.concatenate %7, %10 in 0 : vector<1x128xf32>, vector<1x128xf32> -> vector<2x128xf32>
    %c0_7 = arith.constant 0 : index
    %c0_8 = arith.constant 0 : index
    %c0_9 = arith.constant 0 : index
    %12 = vector.load %arg4[%c0_7, %c0_8, %c0_9] : memref<1x2x128xf32, #tpu.memory_space<vmem>>, vector<1x2x128xf32>
    %13 = vector.shape_cast %12 : vector<1x2x128xf32> to vector<2x128xf32>
    %14 = vector.shape_cast %11 : vector<2x128xf32> to vector<1x2x128xf32>
    tpu.vector_store %arg4[%c0_7, %c0_8, %c0_9], %14 {strides = array<i32>} : memref<1x2x128xf32, #tpu.memory_space<vmem>>, vector<1x2x128xf32>,
    return
  }
  func.func @transform_0(%arg0: i32) -> (i32, i32) {
    %c0_i32 = arith.constant 0 : i32
    %c0_i32_0 = arith.constant 0 : i32
    return %arg0, %c0_i32 : i32, i32
  }
  func.func @transform_1(%arg0: i32) -> (i32, i32) {
    %c0_i32 = arith.constant 0 : i32
    %c0_i32_0 = arith.constant 0 : i32
    %c0_i32_1 = arith.constant 0 : i32
    return %c0_i32, %c0_i32_0 : i32, i32
  }
  func.func @transform_2(%arg0: i32) -> (i32, i32) {
    %c0_i32 = arith.constant 0 : i32
    %c0_i32_0 = arith.constant 0 : i32
    return %arg0, %c0_i32 : i32, i32
  }
  func.func @transform_3(%arg0: i32) -> (i32, i32, i32) {
    %c0_i32 = arith.constant 0 : i32
    %c0_i32_0 = arith.constant 0 : i32
    %c0_i32_1 = arith.constant 0 : i32
    return %arg0, %c0_i32, %c0_i32_0 : i32, i32, i32
  }
}

module attributes {stable_mosaic.version = 11 : i64} {
  func.func @_bn_add_relu_kernel(%arg0: i32, %arg1: memref<128x128xbf16, #tpu.memory_space<vmem>>, %arg2: memref<1x128xf32, #tpu.memory_space<vmem>>, %arg3: memref<1x128xf32, #tpu.memory_space<vmem>>, %arg4: memref<128x128xbf16, #tpu.memory_space<vmem>>, %arg5: memref<128x128xf32, #tpu.memory_space<vmem>>) attributes {dimension_semantics = [#tpu.dimension_semantics<parallel>], iteration_bounds = array<i64: 4>, scalar_prefetch = 0 : i64, scratch_operands = 0 : i64, tpu.core_type = #tpu.core_type<tc>, window_params = [{transform_indices = @transform_0, window_bounds = array<i64: 128, 128>}, {pipeline_mode = #tpu.pipeline_mode<synchronous>, transform_indices = @transform_1, window_bounds = array<i64: 1, 128>}, {pipeline_mode = #tpu.pipeline_mode<synchronous>, transform_indices = @transform_2, window_bounds = array<i64: 1, 128>}, {transform_indices = @transform_3, window_bounds = array<i64: 128, 128>}, {transform_indices = @transform_4, window_bounds = array<i64: 128, 128>}]} {
    %c0 = arith.constant 0 : index
    %c0_0 = arith.constant 0 : index
    %0 = vector.load %arg1[%c0, %c0_0] : memref<128x128xbf16, #tpu.memory_space<vmem>>, vector<128x128xbf16>
    %1 = arith.extf %0 : vector<128x128xbf16> to vector<128x128xf32>
    %c0_1 = arith.constant 0 : index
    %c0_2 = arith.constant 0 : index
    %2 = vector.load %arg2[%c0_1, %c0_2] : memref<1x128xf32, #tpu.memory_space<vmem>>, vector<1x128xf32>
    %3 = vector.broadcast %2 : vector<1x128xf32> to vector<128x128xf32>
    %4 = arith.mulf %1, %3 : vector<128x128xf32>
    %c0_3 = arith.constant 0 : index
    %c0_4 = arith.constant 0 : index
    %5 = vector.load %arg3[%c0_3, %c0_4] : memref<1x128xf32, #tpu.memory_space<vmem>>, vector<1x128xf32>
    %6 = vector.broadcast %5 : vector<1x128xf32> to vector<128x128xf32>
    %7 = arith.addf %4, %6 : vector<128x128xf32>
    %c0_5 = arith.constant 0 : index
    %c0_6 = arith.constant 0 : index
    %8 = vector.load %arg4[%c0_5, %c0_6] : memref<128x128xbf16, #tpu.memory_space<vmem>>, vector<128x128xbf16>
    %9 = arith.extf %8 : vector<128x128xbf16> to vector<128x128xf32>
    %10 = arith.addf %7, %9 : vector<128x128xf32>
    %cst = arith.constant 0.000000e+00 : f32
    %11 = vector.broadcast %cst : f32 to vector<128x128xf32>
    %12 = arith.maximumf %10, %11 : vector<128x128xf32>
    %c0_7 = arith.constant 0 : index
    %c0_8 = arith.constant 0 : index
    %13 = vector.load %arg5[%c0_7, %c0_8] : memref<128x128xf32, #tpu.memory_space<vmem>>, vector<128x128xf32>
    tpu.vector_store %arg5[%c0_7, %c0_8], %12 {strides = array<i32>} : memref<128x128xf32, #tpu.memory_space<vmem>>, vector<128x128xf32>,
    return
  }
  func.func @transform_0(%arg0: i32) -> (i32, i32) {
    %c0_i32 = arith.constant 0 : i32
    %c0_i32_0 = arith.constant 0 : i32
    return %arg0, %c0_i32 : i32, i32
  }
  func.func @transform_1(%arg0: i32) -> (i32, i32) {
    %c0_i32 = arith.constant 0 : i32
    %c0_i32_0 = arith.constant 0 : i32
    %c0_i32_1 = arith.constant 0 : i32
    return %c0_i32, %c0_i32_0 : i32, i32
  }
  func.func @transform_2(%arg0: i32) -> (i32, i32) {
    %c0_i32 = arith.constant 0 : i32
    %c0_i32_0 = arith.constant 0 : i32
    %c0_i32_1 = arith.constant 0 : i32
    return %c0_i32, %c0_i32_0 : i32, i32
  }
  func.func @transform_3(%arg0: i32) -> (i32, i32) {
    %c0_i32 = arith.constant 0 : i32
    %c0_i32_0 = arith.constant 0 : i32
    return %arg0, %c0_i32 : i32, i32
  }
  func.func @transform_4(%arg0: i32) -> (i32, i32) {
    %c0_i32 = arith.constant 0 : i32
    %c0_i32_0 = arith.constant 0 : i32
    return %arg0, %c0_i32 : i32, i32
  }
}

</mosaic_0001>

<llo_original>
// kernel: basic_block_forward.5
$region0: #{basic_block_forward.5}
  #allocation0 [shape = 'u32[]', space=smem, size = 0x4, offset = 0x4, fixed_abs, tag = 'smem constant byte address 0x4 - core index']
  #allocation1 [shape = 'u32[144,128]{1,0:T(1,128)}', space=vmem, size = 0x12000, scoped, tag = 'internal scratch']
  %s0 = inlined_call_operand.vmem [shape: bf16[512,128], index: 0, kind: input, shape index: {}]
  %s1 = inlined_call_operand.vmem [shape: f32[1,128], index: 1, kind: input, shape index: {}]
  %s2 = inlined_call_operand.vmem [shape: f32[1,128], index: 2, kind: input, shape index: {}]
  %s3 = inlined_call_operand.vmem [shape: bf16[512,128], index: 3, kind: input, shape index: {}]
  %s4 = inlined_call_operand.vmem [shape: f32[512,128], index: 4, kind: output, shape index: {}]
  %s5 = sld [smem:[#allocation0]]
  $region49: #{basic_block_forward.5} parent=0
    _
  %s7 = ssub.s32 1, %s5
  %s8 = scalar_select 0, %s7, %s5
  loop: start=0, step=1, limit=6
  $region2: #{basic_block_forward.5} parent=0 // loop_pre_header
    _
  $region3: #{basic_block_forward.5} parent=0 // loop_header
    %s10 = sphi 0, %s14
    %p11 = scmp.ge.s32.totalorder %s10, 6
    %s20 = sphi 0, %s22
    %s23 = sphi 0, %s20
    %s24 = sphi 0, %s23
    %s40 = sphi 0, %s24
    %s44 = sphi 0, %s44
    %s46 = sphi 0, %s44
    %s47 = sphi 0, %s46
    %s61 = sphi 0, %s47
    %s65 = sphi 0, %s65
    %s67 = sphi 0, %s65
    %s68 = sphi 0, %s67
    %s82 = sphi 0, %s68
    %s88 = sphi 0, %s90
    %s91 = sphi 0, %s88
    %s92 = sphi 0, %s91
    %s108 = sphi 0, %s92
    %s114 = sphi 0, %s116
    %s117 = sphi 0, %s114
    %s118 = sphi 0, %s117
    %s134 = sphi 0, %s118
  $region4: #{basic_block_forward.5} parent=0 // loop_header_branch
    %13 = sbr.rel (%p11) target = $region8
  $region5: #{basic_block_forward.5} parent=0 // loop_body
    %s15 = ssub.s32 %s10, 1
    %s16 = ssub.s32 %s10, 2
    %s17 = sadd.s32 %s10, 1
    %s18 = ssub.s32 %s10, %s17
    %p19 = scmp.eq.s32.totalorder %s18, 0
    %s21 = sadd.s32 %s20, 1
    %s22 = scalar_select %p19, %s20, %s21
    %p25 = pneg %p19
    %p26 = scmp.eq.s32.totalorder %s10, 3
    %p27 = por %p25, %p26
    %p28 = scmp.ne.s32.totalorder %s20, %s23
    %p29 = scmp.eq.s32.totalorder %s10, 0
    %p30 = por %p28, %p29
    %p31 = scmp.ne.s32.totalorder %s20, %s23
    %p32 = scmp.eq.s32.totalorder %s15, 3
    %p33 = por %p31, %p32
    %p34 = scmp.ne.s32.totalorder %s23, %s24
    %p35 = scmp.eq.s32.totalorder %s15, 0
    %p36 = por %p34, %p35
    %p37 = scmp.ne.s32.totalorder %s23, %s24
    %p38 = scmp.eq.s32.totalorder %s16, 3
    %p39 = por %p37, %p38
    %p41 = scmp.ne.s32.totalorder %s24, %s40
    %p42 = scmp.eq.s32.totalorder %s16, 0
    %p43 = por %p41, %p42
    %s45 = sadd.s32 %s44, 1
    %p48 = scmp.eq.s32.totalorder %s10, 3
    %p49 = scmp.ne.s32.totalorder %s44, %s46
    %p50 = scmp.eq.s32.totalorder %s10, 0
    %p51 = por %p49, %p50
    %p52 = scmp.ne.s32.totalorder %s44, %s46
    %p53 = scmp.eq.s32.totalorder %s15, 3
    %p54 = por %p52, %p53
    %p55 = scmp.ne.s32.totalorder %s46, %s47
    %p56 = scmp.eq.s32.totalorder %s15, 0
    %p57 = por %p55, %p56
    %p58 = scmp.ne.s32.totalorder %s46, %s47
    %p59 = scmp.eq.s32.totalorder %s16, 3
    %p60 = por %p58, %p59
    %p62 = scmp.ne.s32.totalorder %s47, %s61
    %p63 = scmp.eq.s32.totalorder %s16, 0
    %p64 = por %p62, %p63
    %s66 = sadd.s32 %s65, 1
    %p69 = scmp.eq.s32.totalorder %s10, 3
    %p70 = scmp.ne.s32.totalorder %s65, %s67
    %p71 = scmp.eq.s32.totalorder %s10, 0
    %p72 = por %p70, %p71
    %p73 = scmp.ne.s32.totalorder %s65, %s67
    %p74 = scmp.eq.s32.totalorder %s15, 3
    %p75 = por %p73, %p74
    %p76 = scmp.ne.s32.totalorder %s67, %s68
    %p77 = scmp.eq.s32.totalorder %s15, 0
    %p78 = por %p76, %p77
    %p79 = scmp.ne.s32.totalorder %s67, %s68
    %p80 = scmp.eq.s32.totalorder %s16, 3
    %p81 = por %p79, %p80
    %p83 = scmp.ne.s32.totalorder %s68, %s82
    %p84 = scmp.eq.s32.totalorder %s16, 0
    %p85 = por %p83, %p84
    %s86 = ssub.s32 %s10, %s17
    %p87 = scmp.eq.s32.totalorder %s86, 0
    %s89 = sadd.s32 %s88, 1
    %s90 = scalar_select %p87, %s88, %s89
    %p93 = pneg %p87
    %p94 = scmp.eq.s32.totalorder %s10, 3
    %p95 = por %p93, %p94
    %p96 = scmp.ne.s32.totalorder %s88, %s91
    %p97 = scmp.eq.s32.totalorder %s10, 0
    %p98 = por %p96, %p97
    %p99 = scmp.ne.s32.totalorder %s88, %s91
    %p100 = scmp.eq.s32.totalorder %s15, 3
    %p101 = por %p99, %p100
    %p102 = scmp.ne.s32.totalorder %s91, %s92
    %p103 = scmp.eq.s32.totalorder %s15, 0
    %p104 = por %p102, %p103
    %p105 = scmp.ne.s32.totalorder %s91, %s92
    %p106 = scmp.eq.s32.totalorder %s16, 3
    %p107 = por %p105, %p106
    %p109 = scmp.ne.s32.totalorder %s92, %s108
    %p110 = scmp.eq.s32.totalorder %s16, 0
    %p111 = por %p109, %p110
    %s112 = ssub.s32 %s10, %s17
    %p113 = scmp.eq.s32.totalorder %s112, 0
    %s115 = sadd.s32 %s114, 1
    %s116 = scalar_select %p113, %s114, %s115
    %p119 = pneg %p113
    %p120 = scmp.eq.s32.totalorder %s10, 3
    %p121 = por %p119, %p120
    %p122 = scmp.ne.s32.totalorder %s114, %s117
    %p123 = scmp.eq.s32.totalorder %s10, 0
    %p124 = por %p122, %p123
    %p125 = scmp.ne.s32.totalorder %s114, %s117
    %p126 = scmp.eq.s32.totalorder %s15, 3
    %p127 = por %p125, %p126
    %p128 = scmp.ne.s32.totalorder %s117, %s118
    %p129 = scmp.eq.s32.totalorder %s15, 0
    %p130 = por %p128, %p129
    %p131 = scmp.ne.s32.totalorder %s117, %s118
    %p132 = scmp.eq.s32.totalorder %s16, 3
    %p133 = por %p131, %p132
    %p135 = scmp.ne.s32.totalorder %s118, %s134
    %p136 = scmp.eq.s32.totalorder %s16, 0
    %p137 = por %p135, %p136
    %p138 = scmp.le.s32.totalorder 1, %s10
    %p139 = scmp.lt.s32.totalorder %s10, 5
    %p140 = pnand %p138, %p139
    %p141 = pneg %p140
    // Predicated region
    $region9: #{basic_block_forward.5} parent=5 // pred_check
      _
    $region10: #{basic_block_forward.5} parent=5 // pred_check_branch
      %143 = sbr.rel (%p140) target = $region12
    $region11: #{basic_block_forward.5} parent=5 // pred_region
      %s144 = ssub.s32 %s10, 1
      // Predicated region
      $region13: #{basic_block_forward.5} parent=11 // pred_check
        %p145 = pneg %p57
      $region14: #{basic_block_forward.5} parent=11 // pred_check_branch
        %147 = sbr.rel (%p145) target = $region16
      $region15: #{basic_block_forward.5} parent=11 // pred_region
        _
      $region16: #{basic_block_forward.5} parent=11 // pred_fallthru
        _
      // Predicated region
      $region17: #{basic_block_forward.5} parent=11 // pred_check
        %p148 = pneg %p78
      $region18: #{basic_block_forward.5} parent=11 // pred_check_branch
        %150 = sbr.rel (%p148) target = $region20
      $region19: #{basic_block_forward.5} parent=11 // pred_region
        _
      $region20: #{basic_block_forward.5} parent=11 // pred_fallthru
        _
    $region12: #{basic_block_forward.5} parent=5 // pred_fallthru
      _
    %p151 = scmp.lt.s32.totalorder %s10, 4
    // Predicated region
    $region21: #{basic_block_forward.5} parent=5 // pred_check
      %p152 = pneg %p151
    $region22: #{basic_block_forward.5} parent=5 // pred_check_branch
      %154 = sbr.rel (%p152) target = $region24
    $region23: #{basic_block_forward.5} parent=5 // pred_region
      // Predicated region
      $region25: #{basic_block_forward.5} parent=23 // pred_check
        %p155 = pneg %p30
      $region26: #{basic_block_forward.5} parent=23 // pred_check_branch
        %157 = sbr.rel (%p155) target = $region28
      $region27: #{basic_block_forward.5} parent=23 // pred_region
        %s158 = smul.u32 16, %s10
        %p159 = scmp.lt.s32.totalorder %s158, 63
        %s160 = scalar_select %p159, %s158, 63
        %s161 = smul.addr %s160, 4
        %s162 = scalar_lea.vmem %s0, %s161
        %s163 = smul.u32 16, %s10
      $region28: #{basic_block_forward.5} parent=23 // pred_fallthru
        _
      // Predicated region
      $region29: #{basic_block_forward.5} parent=23 // pred_check
        %p164 = pneg %p98
      $region30: #{basic_block_forward.5} parent=23 // pred_check_branch
        %166 = sbr.rel (%p164) target = $region32
      $region31: #{basic_block_forward.5} parent=23 // pred_region
        %s167 = smul.u32 16, %s10
        %p168 = scmp.lt.s32.totalorder %s167, 63
        %s169 = scalar_select %p168, %s167, 63
        %s170 = smul.addr %s169, 4
        %s171 = scalar_lea.vmem %s3, %s170
        %s172 = smul.u32 16, %s10
      $region32: #{basic_block_forward.5} parent=23 // pred_fallthru
        _
    $region24: #{basic_block_forward.5} parent=5 // pred_fallthru
      _
    %p173 = scmp.le.s32.totalorder 1, %s10
    %p174 = scmp.lt.s32.totalorder %s10, 5
    %p175 = pnand %p173, %p174
    %p176 = pneg %p175
    // Predicated region
    $region33: #{basic_block_forward.5} parent=5 // pred_check
      _
    $region34: #{basic_block_forward.5} parent=5 // pred_check_branch
      %178 = sbr.rel (%p175) target = $region36
    $region35: #{basic_block_forward.5} parent=5 // pred_region
      %s179 = ssub.s32 %s10, 1
      %s180 = smul.u32 16, %s15
      %p181 = scmp.lt.s32.totalorder %s180, 63
      %s182 = scalar_select %p181, %s180, 63
      %s183 = smul.addr %s182, 4
      %s184 = scalar_lea.vmem %s0, %s183
      %p185 = pneg %p36
      %p186 = pneg %p33
      %p187 = pneg %p57
      %p188 = pneg %p54
      %p189 = pneg %p78
      %p190 = pneg %p75
      %s191 = smul.u32 16, %s15
      %p192 = scmp.lt.s32.totalorder %s191, 63
      %s193 = scalar_select %p192, %s191, 63
      %s194 = smul.addr %s193, 4
      %s195 = scalar_lea.vmem %s3, %s194
      %p196 = pneg %p104
      %p197 = pneg %p101
      %p198 = pneg %p130
      %p199 = pneg %p127
      %s200 = smul.u32 16, %s15
      %p201 = scmp.lt.s32.totalorder %s200, 63
      %s202 = scalar_select %p201, %s200, 63
      %s203 = smul.addr %s202, 8
      %s204 = scalar_lea.vmem %s4, %s203
      %s205 = smul.u32 16, %s15
      %p206 = scmp.lt.s32.totalorder %s205, 63
      %s207 = scalar_select %p206, %s205, 63
      %s208 = smul.addr %s207, 4
      %s209 = scalar_lea.vmem %s0, %s208
      %s210 = smul.u32 16, %s15
      %s211 = smul.u32 16, %s15
      %p212 = scmp.lt.s32.totalorder %s211, 63
      %s213 = scalar_select %p212, %s211, 63
      %s214 = smul.addr %s213, 4
      %s215 = scalar_lea.vmem %s3, %s214
      %s216 = smul.u32 16, %s15
      %s217 = smul.u32 16, %s15
      %p218 = scmp.lt.s32.totalorder %s217, 63
      %s219 = scalar_select %p218, %s217, 63
      %s220 = smul.addr %s219, 8
      %s221 = scalar_lea.vmem %s4, %s220
      %s222 = smul.u32 16, %s15
      %v223 = vld [vmem:[%s209] sm:$0xf]
      %v224 = vld [vmem:[%s209 + $0x4] sm:$0xf]
      %v225 = vld [vmem:[%s209 + $0x8] sm:$0xf]
      %v226 = vld [vmem:[%s209 + $0xc] sm:$0xf]
      %v227 = vld [vmem:[%s209 + $0x10] sm:$0xf]
      %v228 = vld [vmem:[%s209 + $0x14] sm:$0xf]
      %v229 = vld [vmem:[%s209 + $0x18] sm:$0xf]
      %v230 = vld [vmem:[%s209 + $0x1c] sm:$0xf]
      %v231 = vld [vmem:[%s209 + $0x20] sm:$0xf]
      %v232 = vld [vmem:[%s209 + $0x24] sm:$0xf]
      %v233 = vld [vmem:[%s209 + $0x28] sm:$0xf]
      %v234 = vld [vmem:[%s209 + $0x2c] sm:$0xf]
      %v235 = vld [vmem:[%s209 + $0x30] sm:$0xf]
      %v236 = vld [vmem:[%s209 + $0x34] sm:$0xf]
      %v237 = vld [vmem:[%s209 + $0x38] sm:$0xf]
      %v238 = vld [vmem:[%s209 + $0x3c] sm:$0xf]
      %v239 = vunpack.c.l.bf16 %v223
      %v240 = vunpack.c.l.bf16 %v224
      %v241 = vunpack.c.l.bf16 %v225
      %v242 = vunpack.c.l.bf16 %v226
      %v243 = vunpack.c.l.bf16 %v227
      %v244 = vunpack.c.l.bf16 %v228
      %v245 = vunpack.c.l.bf16 %v229
      %v246 = vunpack.c.l.bf16 %v230
      %v247 = vunpack.c.l.bf16 %v231
      %v248 = vunpack.c.l.bf16 %v232
      %v249 = vunpack.c.l.bf16 %v233
      %v250 = vunpack.c.l.bf16 %v234
      %v251 = vunpack.c.l.bf16 %v235
      %v252 = vunpack.c.l.bf16 %v236
      %v253 = vunpack.c.l.bf16 %v237
      %v254 = vunpack.c.l.bf16 %v238
      %v255 = vld [vmem:[%s1] sm:$0x1]
      %v257 = vlaneseq
      %v258 = vshrl.u32 %v257, 7
      %v259 = vsub.s32 0, %v258
      %v260 = vrot.slane %v255, %v259
      %v262 = vmul.f32 %v239, %v260
      %v263 = vmul.f32 %v240, %v260
      %v264 = vmul.f32 %v241, %v260
      %v265 = vmul.f32 %v242, %v260
      %v266 = vmul.f32 %v243, %v260
      %v267 = vmul.f32 %v244, %v260
      %v268 = vmul.f32 %v245, %v260
      %v269 = vmul.f32 %v246, %v260
      %v270 = vmul.f32 %v247, %v260
      %v271 = vmul.f32 %v248, %v260
      %v272 = vmul.f32 %v249, %v260
      %v273 = vmul.f32 %v250, %v260
      %v274 = vmul.f32 %v251, %v260
      %v275 = vmul.f32 %v252, %v260
      %v276 = vmul.f32 %v253, %v260
      %v277 = vmul.f32 %v254, %v260
      %v278 = vld [vmem:[%s2] sm:$0x1]
      %v280 = vlaneseq
      %v281 = vshrl.u32 %v280, 7
      %v282 = vsub.s32 0, %v281
      %v283 = vrot.slane %v278, %v282
      %v285 = vadd.f32 %v262, %v283
      %v286 = vadd.f32 %v263, %v283
      %v287 = vadd.f32 %v264, %v283
      %v288 = vadd.f32 %v265, %v283
      %v289 = vadd.f32 %v266, %v283
      %v290 = vadd.f32 %v267, %v283
      %v291 = vadd.f32 %v268, %v283
      %v292 = vadd.f32 %v269, %v283
      %v293 = vadd.f32 %v270, %v283
      %v294 = vadd.f32 %v271, %v283
      %v295 = vadd.f32 %v272, %v283
      %v296 = vadd.f32 %v273, %v283
      %v297 = vadd.f32 %v274, %v283
      %v298 = vadd.f32 %v275, %v283
      %v299 = vadd.f32 %v276, %v283
      %v300 = vadd.f32 %v277, %v283
      %v301 = vld [vmem:[%s215] sm:$0xf]
      %v302 = vld [vmem:[%s215 + $0x4] sm:$0xf]
      %v303 = vld [vmem:[%s215 + $0x8] sm:$0xf]
      %v304 = vld [vmem:[%s215 + $0xc] sm:$0xf]
      %v305 = vld [vmem:[%s215 + $0x10] sm:$0xf]
      %v306 = vld [vmem:[%s215 + $0x14] sm:$0xf]
      %v307 = vld [vmem:[%s215 + $0x18] sm:$0xf]
      %v308 = vld [vmem:[%s215 + $0x1c] sm:$0xf]
      %v309 = vld [vmem:[%s215 + $0x20] sm:$0xf]
      %v310 = vld [vmem:[%s215 + $0x24] sm:$0xf]
      %v311 = vld [vmem:[%s215 + $0x28] sm:$0xf]
      %v312 = vld [vmem:[%s215 + $0x2c] sm:$0xf]
      %v313 = vld [vmem:[%s215 + $0x30] sm:$0xf]
      %v314 = vld [vmem:[%s215 + $0x34] sm:$0xf]
      %v315 = vld [vmem:[%s215 + $0x38] sm:$0xf]
      %v316 = vld [vmem:[%s215 + $0x3c] sm:$0xf]
      %v317 = vunpack.c.l.bf16 %v301
      %v318 = vunpack.c.l.bf16 %v302
      %v319 = vunpack.c.l.bf16 %v303
      %v320 = vunpack.c.l.bf16 %v304
      %v321 = vunpack.c.l.bf16 %v305
      %v322 = vunpack.c.l.bf16 %v306
      %v323 = vunpack.c.l.bf16 %v307
      %v324 = vunpack.c.l.bf16 %v308
      %v325 = vunpack.c.l.bf16 %v309
      %v326 = vunpack.c.l.bf16 %v310
      %v327 = vunpack.c.l.bf16 %v311
      %v328 = vunpack.c.l.bf16 %v312
      %v329 = vunpack.c.l.bf16 %v313
      %v330 = vunpack.c.l.bf16 %v314
      %v331 = vunpack.c.l.bf16 %v315
      %v332 = vunpack.c.l.bf16 %v316
      %v333 = vadd.f32 %v285, %v317
      %v334 = vadd.f32 %v286, %v318
      %v335 = vadd.f32 %v287, %v319
      %v336 = vadd.f32 %v288, %v320
      %v337 = vadd.f32 %v289, %v321
      %v338 = vadd.f32 %v290, %v322
      %v339 = vadd.f32 %v291, %v323
      %v340 = vadd.f32 %v292, %v324
      %v341 = vadd.f32 %v293, %v325
      %v342 = vadd.f32 %v294, %v326
      %v343 = vadd.f32 %v295, %v327
      %v344 = vadd.f32 %v296, %v328
      %v345 = vadd.f32 %v297, %v329
      %v346 = vadd.f32 %v298, %v330
      %v347 = vadd.f32 %v299, %v331
      %v348 = vadd.f32 %v300, %v332
      %v349 = vmax.f32 %v333, 0.0
      %v350 = vmax.f32 %v334, 0.0
      %v351 = vmax.f32 %v335, 0.0
      %v352 = vmax.f32 %v336, 0.0
      %v353 = vmax.f32 %v337, 0.0
      %v354 = vmax.f32 %v338, 0.0
      %v355 = vmax.f32 %v339, 0.0
      %v356 = vmax.f32 %v340, 0.0
      %v357 = vmax.f32 %v341, 0.0
      %v358 = vmax.f32 %v342, 0.0
      %v359 = vmax.f32 %v343, 0.0
      %v360 = vmax.f32 %v344, 0.0
      %v361 = vmax.f32 %v345, 0.0
      %v362 = vmax.f32 %v346, 0.0
      %v363 = vmax.f32 %v347, 0.0
      %v364 = vmax.f32 %v348, 0.0
      %365 = vst [vmem:[%s221] sm:$0xff] %v349
      %366 = vst [vmem:[%s221 + $0x8] sm:$0xff] %v350
      %367 = vst [vmem:[%s221 + $0x10] sm:$0xff] %v351
      %368 = vst [vmem:[%s221 + $0x18] sm:$0xff] %v352
      %369 = vst [vmem:[%s221 + $0x20] sm:$0xff] %v353
      %370 = vst [vmem:[%s221 + $0x28] sm:$0xff] %v354
      %371 = vst [vmem:[%s221 + $0x30] sm:$0xff] %v355
      %372 = vst [vmem:[%s221 + $0x38] sm:$0xff] %v356
      %373 = vst [vmem:[%s221 + $0x40] sm:$0xff] %v357
      %374 = vst [vmem:[%s221 + $0x48] sm:$0xff] %v358
      %375 = vst [vmem:[%s221 + $0x50] sm:$0xff] %v359
      %376 = vst [vmem:[%s221 + $0x58] sm:$0xff] %v360
      %377 = vst [vmem:[%s221 + $0x60] sm:$0xff] %v361
      %378 = vst [vmem:[%s221 + $0x68] sm:$0xff] %v362
      %379 = vst [vmem:[%s221 + $0x70] sm:$0xff] %v363
      %380 = vst [vmem:[%s221 + $0x78] sm:$0xff] %v364
      %s381 = smul.u32 16, %s15
      %p382 = scmp.lt.s32.totalorder %s381, 63
      %s383 = scalar_select %p382, %s381, 63
      %s384 = smul.addr %s383, 8
      %s385 = scalar_lea.vmem %s4, %s384
      // Predicated region
      $region37: #{basic_block_forward.5} parent=35 // pred_check
        %p386 = pneg %p127
      $region38: #{basic_block_forward.5} parent=35 // pred_check_branch
        %388 = sbr.rel (%p386) target = $region40
      $region39: #{basic_block_forward.5} parent=35 // pred_region
        %s389 = smul.u32 16, %s15
      $region40: #{basic_block_forward.5} parent=35 // pred_fallthru
        _
    $region36: #{basic_block_forward.5} parent=5 // pred_fallthru
      _
    %p390 = scmp.le.s32.totalorder 2, %s10
    // Predicated region
    $region41: #{basic_block_forward.5} parent=5 // pred_check
      %p391 = pneg %p390
    $region42: #{basic_block_forward.5} parent=5 // pred_check_branch
      %393 = sbr.rel (%p391) target = $region44
    $region43: #{basic_block_forward.5} parent=5 // pred_region
      %s394 = ssub.s32 %s10, 2
      // Predicated region
      $region45: #{basic_block_forward.5} parent=43 // pred_check
        %p395 = pneg %p133
      $region46: #{basic_block_forward.5} parent=43 // pred_check_branch
        %397 = sbr.rel (%p395) target = $region48
      $region47: #{basic_block_forward.5} parent=43 // pred_region
        %s398 = smul.u32 16, %s16
        %p399 = scmp.lt.s32.totalorder %s398, 63
        %s400 = scalar_select %p399, %s398, 63
        %s401 = smul.addr %s400, 8
        %s402 = scalar_lea.vmem %s4, %s401
      $region48: #{basic_block_forward.5} parent=43 // pred_fallthru
        _
    $region44: #{basic_block_forward.5} parent=5 // pred_fallthru
      _
  $region6: #{basic_block_forward.5} parent=0 // loop_footer
    %s14 = sadd.s32 1, %s10
  $region7: #{basic_block_forward.5} parent=0 // loop_footer_branch
    %9 = sbr.rel target = $region3
  $region8: #{basic_block_forward.5} parent=0 // loop_exit
    _

// kernel: basic_block_forward.3
$region0: #{basic_block_forward.3}
  #allocation0 [shape = 'u32[]', space=smem, size = 0x4, offset = 0x4, fixed_abs, tag = 'smem constant byte address 0x4 - core index']
  #allocation1 [shape = 'u32[144,128]{1,0:T(1,128)}', space=vmem, size = 0x12000, scoped, tag = 'internal scratch']
  %s0 = inlined_call_operand.vmem [shape: bf16[512,128], index: 0, kind: input, shape index: {}]
  %s1 = inlined_call_operand.vmem [shape: bf16[128,128], index: 1, kind: input, shape index: {}]
  %s2 = inlined_call_operand.vmem [shape: bf16[512,128], index: 2, kind: output, shape index: {0}]
  %s3 = inlined_call_operand.vmem [shape: f32[4,2,128], index: 3, kind: output, shape index: {1}]
  %4 = xla_tuple %s2, %s3
  %s5 = sld [smem:[#allocation0]]
  $region49: #{basic_block_forward.3} parent=0
    _
  %s7 = ssub.s32 1, %s5
  %s8 = scalar_select 0, %s7, %s5
  loop: start=0, step=1, limit=6
  $region2: #{basic_block_forward.3} parent=0 // loop_pre_header
    _
  $region3: #{basic_block_forward.3} parent=0 // loop_header
    %s10 = sphi 0, %s14
    %p11 = scmp.ge.s32.totalorder %s10, 6
    %s20 = sphi 0, %s22
    %s23 = sphi 0, %s20
    %s24 = sphi 0, %s23
    %s40 = sphi 0, %s24
    %s44 = sphi 0, %s44
    %s46 = sphi 0, %s44
    %s47 = sphi 0, %s46
    %s61 = sphi 0, %s47
    %s67 = sphi 0, %s69
    %s70 = sphi 0, %s67
    %s71 = sphi 0, %s70
    %s87 = sphi 0, %s71
    %s93 = sphi 0, %s95
    %s96 = sphi 0, %s93
    %s97 = sphi 0, %s96
    %s113 = sphi 0, %s97
  $region4: #{basic_block_forward.3} parent=0 // loop_header_branch
    %13 = sbr.rel (%p11) target = $region8
  $region5: #{basic_block_forward.3} parent=0 // loop_body
    %s15 = ssub.s32 %s10, 1
    %s16 = ssub.s32 %s10, 2
    %s17 = sadd.s32 %s10, 1
    %s18 = ssub.s32 %s10, %s17
    %p19 = scmp.eq.s32.totalorder %s18, 0
    %s21 = sadd.s32 %s20, 1
    %s22 = scalar_select %p19, %s20, %s21
    %p25 = pneg %p19
    %p26 = scmp.eq.s32.totalorder %s10, 3
    %p27 = por %p25, %p26
    %p28 = scmp.ne.s32.totalorder %s20, %s23
    %p29 = scmp.eq.s32.totalorder %s10, 0
    %p30 = por %p28, %p29
    %p31 = scmp.ne.s32.totalorder %s20, %s23
    %p32 = scmp.eq.s32.totalorder %s15, 3
    %p33 = por %p31, %p32
    %p34 = scmp.ne.s32.totalorder %s23, %s24
    %p35 = scmp.eq.s32.totalorder %s15, 0
    %p36 = por %p34, %p35
    %p37 = scmp.ne.s32.totalorder %s23, %s24
    %p38 = scmp.eq.s32.totalorder %s16, 3
    %p39 = por %p37, %p38
    %p41 = scmp.ne.s32.totalorder %s24, %s40
    %p42 = scmp.eq.s32.totalorder %s16, 0
    %p43 = por %p41, %p42
    %s45 = sadd.s32 %s44, 1
    %p48 = scmp.eq.s32.totalorder %s10, 3
    %p49 = scmp.ne.s32.totalorder %s44, %s46
    %p50 = scmp.eq.s32.totalorder %s10, 0
    %p51 = por %p49, %p50
    %p52 = scmp.ne.s32.totalorder %s44, %s46
    %p53 = scmp.eq.s32.totalorder %s15, 3
    %p54 = por %p52, %p53
    %p55 = scmp.ne.s32.totalorder %s46, %s47
    %p56 = scmp.eq.s32.totalorder %s15, 0
    %p57 = por %p55, %p56
    %p58 = scmp.ne.s32.totalorder %s46, %s47
    %p59 = scmp.eq.s32.totalorder %s16, 3
    %p60 = por %p58, %p59
    %p62 = scmp.ne.s32.totalorder %s47, %s61
    %p63 = scmp.eq.s32.totalorder %s16, 0
    %p64 = por %p62, %p63
    %s65 = ssub.s32 %s10, %s17
    %p66 = scmp.eq.s32.totalorder %s65, 0
    %s68 = sadd.s32 %s67, 1
    %s69 = scalar_select %p66, %s67, %s68
    %p72 = pneg %p66
    %p73 = scmp.eq.s32.totalorder %s10, 3
    %p74 = por %p72, %p73
    %p75 = scmp.ne.s32.totalorder %s67, %s70
    %p76 = scmp.eq.s32.totalorder %s10, 0
    %p77 = por %p75, %p76
    %p78 = scmp.ne.s32.totalorder %s67, %s70
    %p79 = scmp.eq.s32.totalorder %s15, 3
    %p80 = por %p78, %p79
    %p81 = scmp.ne.s32.totalorder %s70, %s71
    %p82 = scmp.eq.s32.totalorder %s15, 0
    %p83 = por %p81, %p82
    %p84 = scmp.ne.s32.totalorder %s70, %s71
    %p85 = scmp.eq.s32.totalorder %s16, 3
    %p86 = por %p84, %p85
    %p88 = scmp.ne.s32.totalorder %s71, %s87
    %p89 = scmp.eq.s32.totalorder %s16, 0
    %p90 = por %p88, %p89
    %s91 = ssub.s32 %s10, %s17
    %p92 = scmp.eq.s32.totalorder %s91, 0
    %s94 = sadd.s32 %s93, 1
    %s95 = scalar_select %p92, %s93, %s94
    %p98 = pneg %p92
    %p99 = scmp.eq.s32.totalorder %s10, 3
    %p100 = por %p98, %p99
    %p101 = scmp.ne.s32.totalorder %s93, %s96
    %p102 = scmp.eq.s32.totalorder %s10, 0
    %p103 = por %p101, %p102
    %p104 = scmp.ne.s32.totalorder %s93, %s96
    %p105 = scmp.eq.s32.totalorder %s15, 3
    %p106 = por %p104, %p105
    %p107 = scmp.ne.s32.totalorder %s96, %s97
    %p108 = scmp.eq.s32.totalorder %s15, 0
    %p109 = por %p107, %p108
    %p110 = scmp.ne.s32.totalorder %s96, %s97
    %p111 = scmp.eq.s32.totalorder %s16, 3
    %p112 = por %p110, %p111
    %p114 = scmp.ne.s32.totalorder %s97, %s113
    %p115 = scmp.eq.s32.totalorder %s16, 0
    %p116 = por %p114, %p115
    %p117 = scmp.le.s32.totalorder 1, %s10
    %p118 = scmp.lt.s32.totalorder %s10, 5
    %p119 = pnand %p117, %p118
    %p120 = pneg %p119
    // Predicated region
    $region9: #{basic_block_forward.3} parent=5 // pred_check
      _
    $region10: #{basic_block_forward.3} parent=5 // pred_check_branch
      %122 = sbr.rel (%p119) target = $region12
    $region11: #{basic_block_forward.3} parent=5 // pred_region
      %s123 = ssub.s32 %s10, 1
      // Predicated region
      $region13: #{basic_block_forward.3} parent=11 // pred_check
        %p124 = pneg %p57
      $region14: #{basic_block_forward.3} parent=11 // pred_check_branch
        %126 = sbr.rel (%p124) target = $region16
      $region15: #{basic_block_forward.3} parent=11 // pred_region
        _
      $region16: #{basic_block_forward.3} parent=11 // pred_fallthru
        _
    $region12: #{basic_block_forward.3} parent=5 // pred_fallthru
      _
    %p127 = scmp.lt.s32.totalorder %s10, 4
    // Predicated region
    $region17: #{basic_block_forward.3} parent=5 // pred_check
      %p128 = pneg %p127
    $region18: #{basic_block_forward.3} parent=5 // pred_check_branch
      %130 = sbr.rel (%p128) target = $region20
    $region19: #{basic_block_forward.3} parent=5 // pred_region
      // Predicated region
      $region21: #{basic_block_forward.3} parent=19 // pred_check
        %p131 = pneg %p30
      $region22: #{basic_block_forward.3} parent=19 // pred_check_branch
        %133 = sbr.rel (%p131) target = $region24
      $region23: #{basic_block_forward.3} parent=19 // pred_region
        %s134 = smul.u32 16, %s10
        %p135 = scmp.lt.s32.totalorder %s134, 63
        %s136 = scalar_select %p135, %s134, 63
        %s137 = smul.addr %s136, 4
        %s138 = scalar_lea.vmem %s0, %s137
        %s139 = smul.u32 16, %s10
      $region24: #{basic_block_forward.3} parent=19 // pred_fallthru
        _
    $region20: #{basic_block_forward.3} parent=5 // pred_fallthru
      _
    %p140 = scmp.le.s32.totalorder 1, %s10
    %p141 = scmp.lt.s32.totalorder %s10, 5
    %p142 = pnand %p140, %p141
    %p143 = pneg %p142
    // Predicated region
    $region25: #{basic_block_forward.3} parent=5 // pred_check
      _
    $region26: #{basic_block_forward.3} parent=5 // pred_check_branch
      %145 = sbr.rel (%p142) target = $region28
    $region27: #{basic_block_forward.3} parent=5 // pred_region
      %s146 = ssub.s32 %s10, 1
      %s147 = smul.u32 16, %s15
      %p148 = scmp.lt.s32.totalorder %s147, 63
      %s149 = scalar_select %p148, %s147, 63
      %s150 = smul.addr %s149, 4
      %s151 = scalar_lea.vmem %s0, %s150
      %p152 = pneg %p36
      %p153 = pneg %p33
      %p154 = pneg %p57
      %p155 = pneg %p54
      %p156 = pneg %p83
      %p157 = pneg %p80
      %s158 = smul.u32 16, %s15
      %p159 = scmp.lt.s32.totalorder %s158, 63
      %s160 = scalar_select %p159, %s158, 63
      %s161 = smul.addr %s160, 4
      %s162 = scalar_lea.vmem %s2, %s161
      %p163 = pneg %p109
      %p164 = pneg %p106
      %p165 = scmp.lt.s32.totalorder %s15, 3
      %s166 = scalar_select %p165, %s15, 3
      %s167 = smul.addr %s166, 2
      %s168 = scalar_lea.vmem %s3, %s167
      %s169 = smul.u32 16, %s15
      %p170 = scmp.lt.s32.totalorder %s169, 63
      %s171 = scalar_select %p170, %s169, 63
      %s172 = smul.addr %s171, 4
      %s173 = scalar_lea.vmem %s0, %s172
      %s174 = smul.u32 16, %s15
      %s175 = smul.u32 16, %s15
      %p176 = scmp.lt.s32.totalorder %s175, 63
      %s177 = scalar_select %p176, %s175, 63
      %s178 = smul.addr %s177, 4
      %s179 = scalar_lea.vmem %s2, %s178
      %s180 = smul.u32 16, %s15
      %p181 = scmp.lt.s32.totalorder %s15, 3
      %s182 = scalar_select %p181, %s15, 3
      %s183 = smul.addr %s182, 2
      %s184 = scalar_lea.vmem %s3, %s183
      %v186 = vld [vmem:[%s173] sm:$0xf]
      %v187 = vld [vmem:[%s173 + $0x4] sm:$0xf]
      %v188 = vld [vmem:[%s173 + $0x8] sm:$0xf]
      %v189 = vld [vmem:[%s173 + $0xc] sm:$0xf]
      %v190 = vld [vmem:[%s173 + $0x10] sm:$0xf]
      %v191 = vld [vmem:[%s173 + $0x14] sm:$0xf]
      %v192 = vld [vmem:[%s173 + $0x18] sm:$0xf]
      %v193 = vld [vmem:[%s173 + $0x1c] sm:$0xf]
      %v194 = vld [vmem:[%s173 + $0x20] sm:$0xf]
      %v195 = vld [vmem:[%s173 + $0x24] sm:$0xf]
      %v196 = vld [vmem:[%s173 + $0x28] sm:$0xf]
      %v197 = vld [vmem:[%s173 + $0x2c] sm:$0xf]
      %v198 = vld [vmem:[%s173 + $0x30] sm:$0xf]
      %v199 = vld [vmem:[%s173 + $0x34] sm:$0xf]
      %v200 = vld [vmem:[%s173 + $0x38] sm:$0xf]
      %v201 = vld [vmem:[%s173 + $0x3c] sm:$0xf]
      %v202 = vld [vmem:[%s1] sm:$0xf]
      %v203 = vld [vmem:[%s1 + $0x4] sm:$0xf]
      %v204 = vld [vmem:[%s1 + $0x8] sm:$0xf]
      %v205 = vld [vmem:[%s1 + $0xc] sm:$0xf]
      %v206 = vld [vmem:[%s1 + $0x10] sm:$0xf]
      %v207 = vld [vmem:[%s1 + $0x14] sm:$0xf]
      %v208 = vld [vmem:[%s1 + $0x18] sm:$0xf]
      %v209 = vld [vmem:[%s1 + $0x1c] sm:$0xf]
      %v210 = vld [vmem:[%s1 + $0x20] sm:$0xf]
      %v211 = vld [vmem:[%s1 + $0x24] sm:$0xf]
      %v212 = vld [vmem:[%s1 + $0x28] sm:$0xf]
      %v213 = vld [vmem:[%s1 + $0x2c] sm:$0xf]
      %v214 = vld [vmem:[%s1 + $0x30] sm:$0xf]
      %v215 = vld [vmem:[%s1 + $0x34] sm:$0xf]
      %v216 = vld [vmem:[%s1 + $0x38] sm:$0xf]
      %v217 = vld [vmem:[%s1 + $0x3c] sm:$0xf]
      %v234 = vunpack.c.l.b16 %v186
      %v235 = vunpack.c.l.b16 %v187
      %v236 = vunpack.c.l.b16 %v188
      %v237 = vunpack.c.l.b16 %v189
      %v238 = vunpack.c.l.b16 %v190
      %v239 = vunpack.c.l.b16 %v191
      %v240 = vunpack.c.l.b16 %v192
      %v241 = vunpack.c.l.b16 %v193
      %v242 = vunpack.c.l.b16 %v194
      %v243 = vunpack.c.l.b16 %v195
      %v244 = vunpack.c.l.b16 %v196
      %v245 = vunpack.c.l.b16 %v197
      %v246 = vunpack.c.l.b16 %v198
      %v247 = vunpack.c.l.b16 %v199
      %v248 = vunpack.c.l.b16 %v200
      %v249 = vunpack.c.l.b16 %v201
      %v250 = vpack.c.b16 %v235, %v234
      %v251 = vpack.c.b16 %v237, %v236
      %v252 = vpack.c.b16 %v239, %v238
      %v253 = vpack.c.b16 %v241, %v240
      %v254 = vpack.c.b16 %v243, %v242
      %v255 = vpack.c.b16 %v245, %v244
      %v256 = vpack.c.b16 %v247, %v246
      %v257 = vpack.c.b16 %v249, %v248
      %v282 = vunpack.c.l.b16 %v202
      %v283 = vunpack.c.l.b16 %v203
      %v284 = vunpack.c.l.b16 %v204
      %v285 = vunpack.c.l.b16 %v205
      %v286 = vunpack.c.l.b16 %v206
      %v287 = vunpack.c.l.b16 %v207
      %v288 = vunpack.c.l.b16 %v208
      %v289 = vunpack.c.l.b16 %v209
      %v290 = vunpack.c.l.b16 %v210
      %v291 = vunpack.c.l.b16 %v211
      %v292 = vunpack.c.l.b16 %v212
      %v293 = vunpack.c.l.b16 %v213
      %v294 = vunpack.c.l.b16 %v214
      %v295 = vunpack.c.l.b16 %v215
      %v296 = vunpack.c.l.b16 %v216
      %v297 = vunpack.c.l.b16 %v217
      %v298 = vpack.c.b16 %v283, %v282
      %v299 = vpack.c.b16 %v285, %v284
      %v300 = vpack.c.b16 %v287, %v286
      %v301 = vpack.c.b16 %v289, %v288
      %v302 = vpack.c.b16 %v291, %v290
      %v303 = vpack.c.b16 %v293, %v292
      %v304 = vpack.c.b16 %v295, %v294
      %v305 = vpack.c.b16 %v297, %v296
      %314 = vmatprep.subr.bf16.mxu0 0
      %315 = vmatpush1.bf16.msra.mxu0 %v298
      %316 = vmatprep.subr.bf16.mxu0 0
      %317 = vmatpush1.bf16.msra.mxu0 %v299
      %318 = vmatprep.subr.bf16.mxu0 0
      %319 = vmatpush1.bf16.msra.mxu0 %v300
      %320 = vmatprep.subr.bf16.mxu0 0
      %321 = vmatpush1.bf16.msra.mxu0 %v301
      %322 = vmatprep.subr.bf16.mxu0 0
      %323 = vmatpush1.bf16.msra.mxu0 %v302
      %324 = vmatprep.subr.bf16.mxu0 0
      %325 = vmatpush1.bf16.msra.mxu0 %v303
      %326 = vmatprep.subr.bf16.mxu0 0
      %327 = vmatpush1.bf16.msra.mxu0 %v304
      %328 = vmatprep.subr.bf16.mxu0 0
      %329 = vmatpush1.bf16.msra.mxu0 %v305
      %330 = vmatprep.subr.bf16.mxu0 0
      %331 = vmatpush1.bf16.msra.mxu0 0
      %332 = vmatprep.subr.bf16.mxu0 0
      %333 = vmatpush1.bf16.msra.mxu0 0
      %334 = vmatprep.subr.bf16.mxu0 0
      %335 = vmatpush1.bf16.msra.mxu0 0
      %336 = vmatprep.subr.bf16.mxu0 0
      %337 = vmatpush1.bf16.msra.mxu0 0
      %338 = vmatprep.subr.bf16.mxu0 0
      %339 = vmatpush1.bf16.msra.mxu0 0
      %340 = vmatprep.subr.bf16.mxu0 0
      %341 = vmatpush1.bf16.msra.mxu0 0
      %342 = vmatprep.subr.bf16.mxu0 0
      %343 = vmatpush1.bf16.msra.mxu0 0
      %344 = vmatprep.subr.bf16.mxu0 0
      %345 = vmatpush1.bf16.msra.mxu0 0
      %346 = vmatprep.mubr.bf16.mxu0 0
      %347 = vmatmul.mubr.bf16.gmra.mrb[0].mxu0 %v250
      %v348 = vpop.f32.mrb[0].mxu0
      %v349 = vadd.f32 0.0, %v348
      %v350 = vpop.f32.mrb[0].mxu0
      %v351 = vpop.f32.mrb[0].mxu0
      %v352 = vadd.f32 0.0, %v351
      %v353 = vpop.f32.mrb[0].mxu0
      %354 = vmatprep.mubr.bf16.mxu0 0
      %355 = vmatmul.mubr.bf16.gmra.mrb[0].mxu0 %v251
      %v356 = vpop.f32.mrb[0].mxu0
      %v357 = vadd.f32 0.0, %v356
      %v358 = vpop.f32.mrb[0].mxu0
      %v359 = vpop.f32.mrb[0].mxu0
      %v360 = vadd.f32 0.0, %v359
      %v361 = vpop.f32.mrb[0].mxu0
      %362 = vmatprep.mubr.bf16.mxu0 0
      %363 = vmatmul.mubr.bf16.gmra.mrb[0].mxu0 %v252
      %v364 = vpop.f32.mrb[0].mxu0
      %v365 = vadd.f32 0.0, %v364
      %v366 = vpop.f32.mrb[0].mxu0
      %v367 = vpop.f32.mrb[0].mxu0
      %v368 = vadd.f32 0.0, %v367
      %v369 = vpop.f32.mrb[0].mxu0
      %370 = vmatprep.mubr.bf16.mxu0 0
      %371 = vmatmul.mubr.bf16.gmra.mrb[0].mxu0 %v253
      %v372 = vpop.f32.mrb[0].mxu0
      %v373 = vadd.f32 0.0, %v372
      %v374 = vpop.f32.mrb[0].mxu0
      %v375 = vpop.f32.mrb[0].mxu0
      %v376 = vadd.f32 0.0, %v375
      %v377 = vpop.f32.mrb[0].mxu0
      %378 = vmatprep.mubr.bf16.mxu0 0
      %379 = vmatmul.mubr.bf16.gmra.mrb[0].mxu0 %v254
      %v380 = vpop.f32.mrb[0].mxu0
      %v381 = vadd.f32 0.0, %v380
      %v382 = vpop.f32.mrb[0].mxu0
      %v383 = vpop.f32.mrb[0].mxu0
      %v384 = vadd.f32 0.0, %v383
      %v385 = vpop.f32.mrb[0].mxu0
      %386 = vmatprep.mubr.bf16.mxu0 0
      %387 = vmatmul.mubr.bf16.gmra.mrb[0].mxu0 %v255
      %v388 = vpop.f32.mrb[0].mxu0
      %v389 = vadd.f32 0.0, %v388
      %v390 = vpop.f32.mrb[0].mxu0
      %v391 = vpop.f32.mrb[0].mxu0
      %v392 = vadd.f32 0.0, %v391
      %v393 = vpop.f32.mrb[0].mxu0
      %394 = vmatprep.mubr.bf16.mxu0 0
      %395 = vmatmul.mubr.bf16.gmra.mrb[0].mxu0 %v256
      %v396 = vpop.f32.mrb[0].mxu0
      %v397 = vadd.f32 0.0, %v396
      %v398 = vpop.f32.mrb[0].mxu0
      %v399 = vpop.f32.mrb[0].mxu0
      %v400 = vadd.f32 0.0, %v399
      %v401 = vpop.f32.mrb[0].mxu0
      %402 = vmatprep.mubr.bf16.mxu0 0
      %403 = vmatmul.mubr.bf16.gmra.mrb[0].mxu0 %v257
      %v404 = vpop.f32.mrb[0].mxu0
      %v405 = vadd.f32 0.0, %v404
      %v406 = vpop.f32.mrb[0].mxu0
      %v407 = vpop.f32.mrb[0].mxu0
      %v408 = vadd.f32 0.0, %v407
      %v409 = vpop.f32.mrb[0].mxu0
      %410 = vdwg.mxu0
      %v411 = vpack.c.bf16 %v352, %v349
      %v412 = vpack.c.bf16 %v360, %v357
      %v413 = vpack.c.bf16 %v368, %v365
      %v414 = vpack.c.bf16 %v376, %v373
      %v415 = vpack.c.bf16 %v384, %v381
      %v416 = vpack.c.bf16 %v392, %v389
      %v417 = vpack.c.bf16 %v400, %v397
      %v418 = vpack.c.bf16 %v408, %v405
      %v427 = vunpack.c.l.b16 %v411
      %v428 = vunpack.c.h.b16 %v411
      %v429 = vunpack.c.l.b16 %v412
      %v430 = vunpack.c.h.b16 %v412
      %v431 = vunpack.c.l.b16 %v413
      %v432 = vunpack.c.h.b16 %v413
      %v433 = vunpack.c.l.b16 %v414
      %v434 = vunpack.c.h.b16 %v414
      %v435 = vunpack.c.l.b16 %v415
      %v436 = vunpack.c.h.b16 %v415
      %v437 = vunpack.c.l.b16 %v416
      %v438 = vunpack.c.h.b16 %v416
      %v439 = vunpack.c.l.b16 %v417
      %v440 = vunpack.c.h.b16 %v417
      %v441 = vunpack.c.l.b16 %v418
      %v442 = vunpack.c.h.b16 %v418
      %v443 = vpack.c.b16 %v427, %v427
      %v444 = vpack.c.b16 %v428, %v428
      %v445 = vpack.c.b16 %v429, %v429
      %v446 = vpack.c.b16 %v430, %v430
      %v447 = vpack.c.b16 %v431, %v431
      %v448 = vpack.c.b16 %v432, %v432
      %v449 = vpack.c.b16 %v433, %v433
      %v450 = vpack.c.b16 %v434, %v434
      %v451 = vpack.c.b16 %v435, %v435
      %v452 = vpack.c.b16 %v436, %v436
      %v453 = vpack.c.b16 %v437, %v437
      %v454 = vpack.c.b16 %v438, %v438
      %v455 = vpack.c.b16 %v439, %v439
      %v456 = vpack.c.b16 %v440, %v440
      %v457 = vpack.c.b16 %v441, %v441
      %v458 = vpack.c.b16 %v442, %v442
      %475 = vst [vmem:[%s179] sm:$0xf] %v443
      %476 = vst [vmem:[%s179 + $0x4] sm:$0xf] %v444
      %477 = vst [vmem:[%s179 + $0x8] sm:$0xf] %v445
      %478 = vst [vmem:[%s179 + $0xc] sm:$0xf] %v446
      %479 = vst [vmem:[%s179 + $0x10] sm:$0xf] %v447
      %480 = vst [vmem:[%s179 + $0x14] sm:$0xf] %v448
      %481 = vst [vmem:[%s179 + $0x18] sm:$0xf] %v449
      %482 = vst [vmem:[%s179 + $0x1c] sm:$0xf] %v450
      %483 = vst [vmem:[%s179 + $0x20] sm:$0xf] %v451
      %484 = vst [vmem:[%s179 + $0x24] sm:$0xf] %v452
      %485 = vst [vmem:[%s179 + $0x28] sm:$0xf] %v453
      %486 = vst [vmem:[%s179 + $0x2c] sm:$0xf] %v454
      %487 = vst [vmem:[%s179 + $0x30] sm:$0xf] %v455
      %488 = vst [vmem:[%s179 + $0x34] sm:$0xf] %v456
      %489 = vst [vmem:[%s179 + $0x38] sm:$0xf] %v457
      %490 = vst [vmem:[%s179 + $0x3c] sm:$0xf] %v458
      %v491 = vunpack.c.l.bf16 %v411
      %v492 = vunpack.c.h.bf16 %v411
      %v493 = vunpack.c.l.bf16 %v412
      %v494 = vunpack.c.h.bf16 %v412
      %v495 = vunpack.c.l.bf16 %v413
      %v496 = vunpack.c.h.bf16 %v413
      %v497 = vunpack.c.l.bf16 %v414
      %v498 = vunpack.c.h.bf16 %v414
      %v499 = vunpack.c.l.bf16 %v415
      %v500 = vunpack.c.h.bf16 %v415
      %v501 = vunpack.c.l.bf16 %v416
      %v502 = vunpack.c.h.bf16 %v416
      %v503 = vunpack.c.l.bf16 %v417
      %v504 = vunpack.c.h.bf16 %v417
      %v505 = vunpack.c.l.bf16 %v418
      %v506 = vunpack.c.h.bf16 %v418
      %v507 = vadd.f32 %v491, %v492
      %v508 = vadd.f32 %v507, %v493
      %v509 = vadd.f32 %v508, %v494
      %v510 = vadd.f32 %v509, %v495
      %v511 = vadd.f32 %v510, %v496
      %v512 = vadd.f32 %v511, %v497
      %v513 = vadd.f32 %v512, %v498
      %v514 = vadd.f32 %v513, %v499
      %v515 = vadd.f32 %v514, %v500
      %v516 = vadd.f32 %v515, %v501
      %v517 = vadd.f32 %v516, %v502
      %v518 = vadd.f32 %v517, %v503
      %v519 = vadd.f32 %v518, %v504
      %v520 = vadd.f32 %v519, %v505
      %v521 = vadd.f32 %v520, %v506
      %v522 = vrot.slane %v521, 4
      %v523 = vadd.f32 %v521, %v522
      %v524 = vrot.slane %v523, 2
      %v525 = vadd.f32 %v523, %v524
      %v526 = vrot.slane %v525, 1
      %v527 = vadd.f32 %v525, %v526
      %v528 = vmul.f32 %v491, %v491
      %v529 = vmul.f32 %v492, %v492
      %v530 = vmul.f32 %v493, %v493
      %v531 = vmul.f32 %v494, %v494
      %v532 = vmul.f32 %v495, %v495
      %v533 = vmul.f32 %v496, %v496
      %v534 = vmul.f32 %v497, %v497
      %v535 = vmul.f32 %v498, %v498
      %v536 = vmul.f32 %v499, %v499
      %v537 = vmul.f32 %v500, %v500
      %v538 = vmul.f32 %v501, %v501
      %v539 = vmul.f32 %v502, %v502
      %v540 = vmul.f32 %v503, %v503
      %v541 = vmul.f32 %v504, %v504
      %v542 = vmul.f32 %v505, %v505
      %v543 = vmul.f32 %v506, %v506
      %v544 = vadd.f32 %v528, %v529
      %v545 = vadd.f32 %v544, %v530
      %v546 = vadd.f32 %v545, %v531
      %v547 = vadd.f32 %v546, %v532
      %v548 = vadd.f32 %v547, %v533
      %v549 = vadd.f32 %v548, %v534
      %v550 = vadd.f32 %v549, %v535
      %v551 = vadd.f32 %v550, %v536
      %v552 = vadd.f32 %v551, %v537
      %v553 = vadd.f32 %v552, %v538
      %v554 = vadd.f32 %v553, %v539
      %v555 = vadd.f32 %v554, %v540
      %v556 = vadd.f32 %v555, %v541
      %v557 = vadd.f32 %v556, %v542
      %v558 = vadd.f32 %v557, %v543
      %v559 = vrot.slane %v558, 4
      %v560 = vadd.f32 %v558, %v559
      %v561 = vrot.slane %v560, 2
      %v562 = vadd.f32 %v560, %v561
      %v563 = vrot.slane %v562, 1
      %v564 = vadd.f32 %v562, %v563
      %vm565 = vcmask 1040384
      %v566 = vsel %vm565, %v527, %v564
      %567 = vst [vmem:[%s184] sm:$0x3] %v566
      %s568 = smul.u32 16, %s15
      %p569 = scmp.lt.s32.totalorder %s568, 63
      %s570 = scalar_select %p569, %s568, 63
      %s571 = smul.addr %s570, 4
      %s572 = scalar_lea.vmem %s2, %s571
      %p573 = scmp.lt.s32.totalorder %s15, 3
      %s574 = scalar_select %p573, %s15, 3
      %s575 = smul.addr %s574, 2
      %s576 = scalar_lea.vmem %s3, %s575
      // Predicated region
      $region29: #{basic_block_forward.3} parent=27 // pred_check
        %p577 = pneg %p80
      $region30: #{basic_block_forward.3} parent=27 // pred_check_branch
        %579 = sbr.rel (%p577) target = $region32
      $region31: #{basic_block_forward.3} parent=27 // pred_region
        %s580 = smul.u32 16, %s15
      $region32: #{basic_block_forward.3} parent=27 // pred_fallthru
        _
      // Predicated region
      $region33: #{basic_block_forward.3} parent=27 // pred_check
        %p581 = pneg %p106
      $region34: #{basic_block_forward.3} parent=27 // pred_check_branch
        %583 = sbr.rel (%p581) target = $region36
      $region35: #{basic_block_forward.3} parent=27 // pred_region
        _
      $region36: #{basic_block_forward.3} parent=27 // pred_fallthru
        _
    $region28: #{basic_block_forward.3} parent=5 // pred_fallthru
      _
    %p584 = scmp.le.s32.totalorder 2, %s10
    // Predicated region
    $region37: #{basic_block_forward.3} parent=5 // pred_check
      %p585 = pneg %p584
    $region38: #{basic_block_forward.3} parent=5 // pred_check_branch
      %587 = sbr.rel (%p585) target = $region40
    $region39: #{basic_block_forward.3} parent=5 // pred_region
      %s588 = ssub.s32 %s10, 2
      // Predicated region
      $region41: #{basic_block_forward.3} parent=39 // pred_check
        %p589 = pneg %p86
      $region42: #{basic_block_forward.3} parent=39 // pred_check_branch
        %591 = sbr.rel (%p589) target = $region44
      $region43: #{basic_block_forward.3} parent=39 // pred_region
        %s592 = smul.u32 16, %s16
        %p593 = scmp.lt.s32.totalorder %s592, 63
        %s594 = scalar_select %p593, %s592, 63
        %s595 = smul.addr %s594, 4
        %s596 = scalar_lea.vmem %s2, %s595
      $region44: #{basic_block_forward.3} parent=39 // pred_fallthru
        _
      // Predicated region
      $region45: #{basic_block_forward.3} parent=39 // pred_check
        %p597 = pneg %p112
      $region46: #{basic_block_forward.3} parent=39 // pred_check_branch
        %599 = sbr.rel (%p597) target = $region48
      $region47: #{basic_block_forward.3} parent=39 // pred_region
        %p600 = scmp.lt.s32.totalorder %s16, 3
        %s601 = scalar_select %p600, %s16, 3
        %s602 = smul.addr %s601, 2
        %s603 = scalar_lea.vmem %s3, %s602
      $region48: #{basic_block_forward.3} parent=39 // pred_fallthru
        _
    $region40: #{basic_block_forward.3} parent=5 // pred_fallthru
      _
  $region6: #{basic_block_forward.3} parent=0 // loop_footer
    %s14 = sadd.s32 1, %s10
  $region7: #{basic_block_forward.3} parent=0 // loop_footer_branch
    %9 = sbr.rel target = $region3
  $region8: #{basic_block_forward.3} parent=0 // loop_exit
    _

</llo_original>
